<compile_context>
chip_gen: v7x
topology: tpu7x:2x2x1
jax: 0.10.0
libtpu: 0.0.40
codegen_flags: <defaults>
</compile_context>

<pallas_src>
import jax
import jax.numpy as jnp
from jax.experimental import pallas as pl
from jax.experimental.pallas import tpu as pltpu


def _round_up(v, m):
    return ((v + m - 1) // m) * m


def _make_kernel(t_tile, n_tile, h_pad):
    def kernel(x_ref, wih_ref, whh_ref, b_ref, y_ref, h_ref, xproj_ref):
        # x_ref:     (t_tile, n_tile, C_pad) bf16 — time blocks arrive in reversed order
        # wih_ref:   (C_pad, H_pad) bf16, whh_ref: (H_pad, H_pad) bf16 (pre-transposed)
        # b_ref:     (1, H_pad) f32 — combined b_ih + b_hh
        # y_ref:     (t_tile, n_tile, H_pad) f32
        # h_ref:     (n_tile, H_pad) f32 VMEM scratch — recurrent carry across time blocks
        # xproj_ref: (t_tile, n_tile, H_pad) f32 VMEM scratch — hoisted input projection

        # Fresh hidden state at the start of every reversed time sweep.
        @pl.when(pl.program_id(1) == 0)
        def _():
            h_ref[...] = jnp.zeros_like(h_ref)

        c_pad = x_ref.shape[-1]

        # Hoisted, time-parallel input projection: one big MXU matmul per tile,
        # with the combined bias folded in.
        x_flat = x_ref[...].reshape(t_tile * n_tile, c_pad)
        xproj = (
            jnp.dot(x_flat, wih_ref[...], preferred_element_type=jnp.float32)
            + b_ref[...]
        )
        xproj_ref[...] = xproj.reshape(t_tile, n_tile, h_pad)

        whh = whh_ref[...]

        # Serial recurrence over the tile, walking local time in reverse
        # (the second half of the flip/flip sandwich).
        def step(s, h):
            lt = t_tile - 1 - s
            pre = xproj_ref[lt] + jnp.dot(
                h.astype(whh.dtype), whh, preferred_element_type=jnp.float32
            )
            h_new = jnp.tanh(pre)
            y_ref[lt] = h_new.astype(y_ref.dtype)
            return h_new

        h_ref[...] = jax.lax.fori_loop(0, t_tile, step, h_ref[...], unroll=True)

    return kernel


def reverse_rnn(x, w_ih, w_hh, b_ih, b_hh, *, t_tile=8, n_tile=8):
    """Reverse(Serial([tanh RNNCell])).forward: rnn(x.flip(0)).flip(0).

    x: (T, N, C) float32, time-major.
    w_ih: (H, C), w_hh: (H, H), b_ih/b_hh: (H,)  — PyTorch nn.RNN param shapes.
    """
    T, N, C = x.shape
    H = w_ih.shape[0]

    c_pad = _round_up(C, 128)
    h_pad = _round_up(H, 128)
    n_pad = _round_up(N, n_tile)
    n_blocks = n_pad // n_tile
    t_blocks = pl.cdiv(T, t_tile)
    t_padded = t_blocks * t_tile
    t_front = t_padded - T  # pad at the FRONT of time: processed last in reverse

    # Zero-padded, lane-dense operands.  bf16 matmul operands, f32 bias.
    x_p = jnp.zeros((t_padded, n_pad, c_pad), jnp.bfloat16)
    x_p = x_p.at[t_front:, :N, :C].set(x.astype(jnp.bfloat16))
    wih_t = jnp.zeros((c_pad, h_pad), jnp.bfloat16)
    wih_t = wih_t.at[:C, :H].set(jnp.asarray(w_ih, jnp.float32).T.astype(jnp.bfloat16))
    whh_t = jnp.zeros((h_pad, h_pad), jnp.bfloat16)
    whh_t = whh_t.at[:H, :H].set(jnp.asarray(w_hh, jnp.float32).T.astype(jnp.bfloat16))
    bias = jnp.zeros((1, h_pad), jnp.float32)
    bias = bias.at[0, :H].set(
        jnp.asarray(b_ih, jnp.float32) + jnp.asarray(b_hh, jnp.float32)
    )

    grid_spec = pltpu.PrefetchScalarGridSpec(
        num_scalar_prefetch=0,
        grid=(n_blocks, t_blocks),
        in_specs=[
            # first flip: grid step tb reads time block (t_blocks - 1 - tb)
            pl.BlockSpec(
                (t_tile, n_tile, c_pad), lambda nb, tb: (t_blocks - 1 - tb, nb, 0)
            ),
            # loop-invariant weights / combined bias
            pl.BlockSpec((c_pad, h_pad), lambda nb, tb: (0, 0)),
            pl.BlockSpec((h_pad, h_pad), lambda nb, tb: (0, 0)),
            pl.BlockSpec((1, h_pad), lambda nb, tb: (0, 0)),
        ],
        # second flip: grid step tb writes time block (t_blocks - 1 - tb)
        out_specs=pl.BlockSpec(
            (t_tile, n_tile, h_pad), lambda nb, tb: (t_blocks - 1 - tb, nb, 0)
        ),
        scratch_shapes=[
            pltpu.VMEM((n_tile, h_pad), jnp.float32),          # recurrent carry
            pltpu.VMEM((t_tile, n_tile, h_pad), jnp.float32),  # hoisted x-projection
        ],
    )

    y_p = pl.pallas_call(
        _make_kernel(t_tile, n_tile, h_pad),
        out_shape=jax.ShapeDtypeStruct((t_padded, n_pad, h_pad), jnp.float32),
        grid_spec=grid_spec,
        compiler_params=pltpu.CompilerParams(
            dimension_semantics=("parallel", "arbitrary"),  # batch parallel, time serial
        ),
    )(x_p, wih_t, whh_t, bias)

    return y_p[t_front:, :N, :H]


def _reference(x, w_ih, w_hh, b_ih, b_hh):
    """Pure-JAX reference: rnn(x.flip(0)).flip(0), mirroring the kernel's
    bf16 matmul operands with f32 accumulation / f32 elementwise math."""
    wih_bf = jnp.asarray(w_ih, jnp.float32).astype(jnp.bfloat16)
    whh_bf = jnp.asarray(w_hh, jnp.float32).astype(jnp.bfloat16)
    bias = jnp.asarray(b_ih, jnp.float32) + jnp.asarray(b_hh, jnp.float32)
    x_bf = x.astype(jnp.bfloat16)

    def step(h, x_t):
        pre = (
            jnp.dot(x_t, wih_bf.T, preferred_element_type=jnp.float32)
            + bias
            + jnp.dot(h.astype(jnp.bfloat16), whh_bf.T,
                      preferred_element_type=jnp.float32)
        )
        h_new = jnp.tanh(pre)
        return h_new, h_new

    h0 = jnp.zeros((x.shape[1], w_hh.shape[0]), jnp.float32)
    _, ys = jax.lax.scan(step, h0, x_bf[::-1])
    return ys[::-1]


if __name__ == "__main__":
    # T not a multiple of t_tile -> exercises the front-of-time padding path.
    T, N, C, H = 12, 8, 16, 32

    key = jax.random.PRNGKey(0)
    kx, k1, k2, k3, k4 = jax.random.split(key, 5)

    # Deterministic synthetic parameters (shapes match torch.nn.RNN single layer).
    # TODO(synk): PyTorch init here would be orthogonal_/uniform; synthetic normal init used instead.
    x = jax.random.normal(kx, (T, N, C), jnp.float32)
    w_ih = 0.1 * jax.random.normal(k1, (H, C), jnp.float32)
    w_hh = 0.1 * jax.random.normal(k2, (H, H), jnp.float32)
    b_ih = 0.1 * jax.random.normal(k3, (H,), jnp.float32)
    b_hh = 0.1 * jax.random.normal(k4, (H,), jnp.float32)

    y = jax.block_until_ready(reverse_rnn(x, w_ih, w_hh, b_ih, b_hh))

    y_ref = jax.block_until_ready(_reference(x, w_ih, w_hh, b_ih, b_hh))
    assert y.shape == (T, N, H)
    max_err = jnp.max(jnp.abs(y - y_ref))
    assert jnp.allclose(y, y_ref, rtol=2e-3, atol=2e-3), f"max err {max_err}"

    print("KERNEL_OK")
</pallas_src>

<mosaic_0001>
module attributes {stable_mosaic.version = 11 : i64} {
  func.func @kernel(%arg0: i32, %arg1: i32, %arg2: memref<8x8x128xbf16, #tpu.memory_space<vmem>>, %arg3: memref<128x128xbf16, #tpu.memory_space<vmem>>, %arg4: memref<128x128xbf16, #tpu.memory_space<vmem>>, %arg5: memref<1x128xf32, #tpu.memory_space<vmem>>, %arg6: memref<8x8x128xf32, #tpu.memory_space<vmem>>, %arg7: memref<8x128xf32, #tpu.memory_space<vmem>>, %arg8: memref<8x8x128xf32, #tpu.memory_space<vmem>>) attributes {dimension_semantics = [#tpu.dimension_semantics<parallel>, #tpu.dimension_semantics<arbitrary>], iteration_bounds = array<i64: 1, 2>, scalar_prefetch = 0 : i64, scratch_operands = 2 : i64, tpu.core_type = #tpu.core_type<tc>, window_params = [{transform_indices = @transform_0, window_bounds = array<i64: 8, 8, 128>}, {pipeline_mode = #tpu.pipeline_mode<synchronous>, transform_indices = @transform_1, window_bounds = array<i64: 128, 128>}, {pipeline_mode = #tpu.pipeline_mode<synchronous>, transform_indices = @transform_2, window_bounds = array<i64: 128, 128>}, {pipeline_mode = #tpu.pipeline_mode<synchronous>, transform_indices = @transform_3, window_bounds = array<i64: 1, 128>}, {transform_indices = @transform_4, window_bounds = array<i64: 8, 8, 128>}]} {
    %c0_i32 = arith.constant 0 : i32
    %0 = arith.cmpi eq, %arg1, %c0_i32 : i32
    %1 = arith.extui %0 : i1 to i32
    %c0_i32_0 = arith.constant 0 : i32
    %2 = arith.cmpi ne, %1, %c0_i32_0 : i32
    scf.if %2 {
      %cst_65 = arith.constant 0.000000e+00 : f32
      %111 = vector.broadcast %cst_65 : f32 to vector<8x128xf32>
      %c0_66 = arith.constant 0 : index
      %c0_67 = arith.constant 0 : index
      %112 = vector.load %arg7[%c0_66, %c0_67] : memref<8x128xf32, #tpu.memory_space<vmem>>, vector<8x128xf32>
      tpu.vector_store %arg7[%c0_66, %c0_67], %111 {strides = array<i32>} : memref<8x128xf32, #tpu.memory_space<vmem>>, vector<8x128xf32>,
    } else {
    }
    %c0 = arith.constant 0 : index
    %c0_1 = arith.constant 0 : index
    %c0_2 = arith.constant 0 : index
    %3 = vector.load %arg2[%c0, %c0_1, %c0_2] : memref<8x8x128xbf16, #tpu.memory_space<vmem>>, vector<8x8x128xbf16>
    %4 = vector.shape_cast %3 : vector<8x8x128xbf16> to vector<64x128xbf16>
    %c0_3 = arith.constant 0 : index
    %c0_4 = arith.constant 0 : index
    %5 = vector.load %arg3[%c0_3, %c0_4] : memref<128x128xbf16, #tpu.memory_space<vmem>>, vector<128x128xbf16>
    %cst = arith.constant dense<0.000000e+00> : vector<64x128xf32>
    %6 = tpu.matmul %4, %5, %cst {dimension_numbers = #tpu.dot_dimension_numbers<[1], [0], [0], [1], [0, 0, 1, 1], [], []>} : vector<64x128xbf16>, vector<128x128xbf16>, vector<64x128xf32> -> vector<64x128xf32>
    %c0_5 = arith.constant 0 : index
    %c0_6 = arith.constant 0 : index
    %7 = vector.load %arg5[%c0_5, %c0_6] : memref<1x128xf32, #tpu.memory_space<vmem>>, vector<1x128xf32>
    %8 = vector.broadcast %7 : vector<1x128xf32> to vector<64x128xf32>
    %9 = arith.addf %6, %8 : vector<64x128xf32>
    %10 = vector.shape_cast %9 : vector<64x128xf32> to vector<8x8x128xf32>
    %c0_7 = arith.constant 0 : index
    %c0_8 = arith.constant 0 : index
    %c0_9 = arith.constant 0 : index
    %11 = vector.load %arg8[%c0_7, %c0_8, %c0_9] : memref<8x8x128xf32, #tpu.memory_space<vmem>>, vector<8x8x128xf32>
    tpu.vector_store %arg8[%c0_7, %c0_8, %c0_9], %10 {strides = array<i32>} : memref<8x8x128xf32, #tpu.memory_space<vmem>>, vector<8x8x128xf32>,
    %c0_10 = arith.constant 0 : index
    %c0_11 = arith.constant 0 : index
    %12 = vector.load %arg4[%c0_10, %c0_11] : memref<128x128xbf16, #tpu.memory_space<vmem>>, vector<128x128xbf16>
    %c0_12 = arith.constant 0 : index
    %c0_13 = arith.constant 0 : index
    %13 = vector.load %arg7[%c0_12, %c0_13] : memref<8x128xf32, #tpu.memory_space<vmem>>, vector<8x128xf32>
    %c0_i32_14 = arith.constant 0 : i32
    %c7_i32 = arith.constant 7 : i32
    %14 = arith.subi %c7_i32, %c0_i32_14 : i32
    %15 = arith.index_cast %14 : i32 to index
    %c0_15 = arith.constant 0 : index
    %c0_16 = arith.constant 0 : index
    %16 = vector.load %arg8[%15, %c0_15, %c0_16] : memref<8x8x128xf32, #tpu.memory_space<vmem>>, vector<1x8x128xf32>
    %17 = vector.shape_cast %16 : vector<1x8x128xf32> to vector<8x128xf32>
    %18 = arith.truncf %13 : vector<8x128xf32> to vector<8x128xbf16>
    %cst_17 = arith.constant dense<0.000000e+00> : vector<8x128xf32>
    %19 = tpu.matmul %18, %12, %cst_17 {dimension_numbers = #tpu.dot_dimension_numbers<[1], [0], [0], [1], [0, 0, 1, 1], [], []>} : vector<8x128xbf16>, vector<128x128xbf16>, vector<8x128xf32> -> vector<8x128xf32>
    %20 = arith.addf %17, %19 : vector<8x128xf32>
    %21 = math.tanh %20 : vector<8x128xf32>
    %22 = arith.index_cast %14 : i32 to index
    %c0_18 = arith.constant 0 : index
    %c0_19 = arith.constant 0 : index
    %23 = vector.load %arg6[%22, %c0_18, %c0_19] : memref<8x8x128xf32, #tpu.memory_space<vmem>>, vector<1x8x128xf32>
    %24 = vector.shape_cast %23 : vector<1x8x128xf32> to vector<8x128xf32>
    %25 = vector.shape_cast %21 : vector<8x128xf32> to vector<1x8x128xf32>
    tpu.vector_store %arg6[%22, %c0_18, %c0_19], %25 {strides = array<i32>} : memref<8x8x128xf32, #tpu.memory_space<vmem>>, vector<1x8x128xf32>,
    %c1_i32 = arith.constant 1 : i32
    %c7_i32_20 = arith.constant 7 : i32
    %26 = arith.subi %c7_i32_20, %c1_i32 : i32
    %27 = arith.index_cast %26 : i32 to index
    %c0_21 = arith.constant 0 : index
    %c0_22 = arith.constant 0 : index
    %28 = vector.load %arg8[%27, %c0_21, %c0_22] : memref<8x8x128xf32, #tpu.memory_space<vmem>>, vector<1x8x128xf32>
    %29 = vector.shape_cast %28 : vector<1x8x128xf32> to vector<8x128xf32>
    %30 = arith.truncf %21 : vector<8x128xf32> to vector<8x128xbf16>
    %cst_23 = arith.constant dense<0.000000e+00> : vector<8x128xf32>
    %31 = tpu.matmul %30, %12, %cst_23 {dimension_numbers = #tpu.dot_dimension_numbers<[1], [0], [0], [1], [0, 0, 1, 1], [], []>} : vector<8x128xbf16>, vector<128x128xbf16>, vector<8x128xf32> -> vector<8x128xf32>
    %32 = arith.addf %29, %31 : vector<8x128xf32>
    %33 = math.tanh %32 : vector<8x128xf32>
    %34 = arith.index_cast %26 : i32 to index
    %c0_24 = arith.constant 0 : index
    %c0_25 = arith.constant 0 : index
    %35 = vector.load %arg6[%34, %c0_24, %c0_25] : memref<8x8x128xf32, #tpu.memory_space<vmem>>, vector<1x8x128xf32>
    %36 = vector.shape_cast %35 : vector<1x8x128xf32> to vector<8x128xf32>
    %37 = vector.shape_cast %33 : vector<8x128xf32> to vector<1x8x128xf32>
    tpu.vector_store %arg6[%34, %c0_24, %c0_25], %37 {strides = array<i32>} : memref<8x8x128xf32, #tpu.memory_space<vmem>>, vector<1x8x128xf32>,
    %c2_i32 = arith.constant 2 : i32
    %c7_i32_26 = arith.constant 7 : i32
    %38 = arith.subi %c7_i32_26, %c2_i32 : i32
    %39 = arith.index_cast %38 : i32 to index
    %c0_27 = arith.constant 0 : index
    %c0_28 = arith.constant 0 : index
    %40 = vector.load %arg8[%39, %c0_27, %c0_28] : memref<8x8x128xf32, #tpu.memory_space<vmem>>, vector<1x8x128xf32>
    %41 = vector.shape_cast %40 : vector<1x8x128xf32> to vector<8x128xf32>
    %42 = arith.truncf %33 : vector<8x128xf32> to vector<8x128xbf16>
    %cst_29 = arith.constant dense<0.000000e+00> : vector<8x128xf32>
    %43 = tpu.matmul %42, %12, %cst_29 {dimension_numbers = #tpu.dot_dimension_numbers<[1], [0], [0], [1], [0, 0, 1, 1], [], []>} : vector<8x128xbf16>, vector<128x128xbf16>, vector<8x128xf32> -> vector<8x128xf32>
    %44 = arith.addf %41, %43 : vector<8x128xf32>
    %45 = math.tanh %44 : vector<8x128xf32>
    %46 = arith.index_cast %38 : i32 to index
    %c0_30 = arith.constant 0 : index
    %c0_31 = arith.constant 0 : index
    %47 = vector.load %arg6[%46, %c0_30, %c0_31] : memref<8x8x128xf32, #tpu.memory_space<vmem>>, vector<1x8x128xf32>
    %48 = vector.shape_cast %47 : vector<1x8x128xf32> to vector<8x128xf32>
    %49 = vector.shape_cast %45 : vector<8x128xf32> to vector<1x8x128xf32>
    tpu.vector_store %arg6[%46, %c0_30, %c0_31], %49 {strides = array<i32>} : memref<8x8x128xf32, #tpu.memory_space<vmem>>, vector<1x8x128xf32>,
    %c3_i32 = arith.constant 3 : i32
    %c7_i32_32 = arith.constant 7 : i32
    %50 = arith.subi %c7_i32_32, %c3_i32 : i32
    %51 = arith.index_cast %50 : i32 to index
    %c0_33 = arith.constant 0 : index
    %c0_34 = arith.constant 0 : index
    %52 = vector.load %arg8[%51, %c0_33, %c0_34] : memref<8x8x128xf32, #tpu.memory_space<vmem>>, vector<1x8x128xf32>
    %53 = vector.shape_cast %52 : vector<1x8x128xf32> to vector<8x128xf32>
    %54 = arith.truncf %45 : vector<8x128xf32> to vector<8x128xbf16>
    %cst_35 = arith.constant dense<0.000000e+00> : vector<8x128xf32>
    %55 = tpu.matmul %54, %12, %cst_35 {dimension_numbers = #tpu.dot_dimension_numbers<[1], [0], [0], [1], [0, 0, 1, 1], [], []>} : vector<8x128xbf16>, vector<128x128xbf16>, vector<8x128xf32> -> vector<8x128xf32>
    %56 = arith.addf %53, %55 : vector<8x128xf32>
    %57 = math.tanh %56 : vector<8x128xf32>
    %58 = arith.index_cast %50 : i32 to index
    %c0_36 = arith.constant 0 : index
    %c0_37 = arith.constant 0 : index
    %59 = vector.load %arg6[%58, %c0_36, %c0_37] : memref<8x8x128xf32, #tpu.memory_space<vmem>>, vector<1x8x128xf32>
    %60 = vector.shape_cast %59 : vector<1x8x128xf32> to vector<8x128xf32>
    %61 = vector.shape_cast %57 : vector<8x128xf32> to vector<1x8x128xf32>
    tpu.vector_store %arg6[%58, %c0_36, %c0_37], %61 {strides = array<i32>} : memref<8x8x128xf32, #tpu.memory_space<vmem>>, vector<1x8x128xf32>,
    %c4_i32 = arith.constant 4 : i32
    %c7_i32_38 = arith.constant 7 : i32
    %62 = arith.subi %c7_i32_38, %c4_i32 : i32
    %63 = arith.index_cast %62 : i32 to index
    %c0_39 = arith.constant 0 : index
    %c0_40 = arith.constant 0 : index
    %64 = vector.load %arg8[%63, %c0_39, %c0_40] : memref<8x8x128xf32, #tpu.memory_space<vmem>>, vector<1x8x128xf32>
    %65 = vector.shape_cast %64 : vector<1x8x128xf32> to vector<8x128xf32>
    %66 = arith.truncf %57 : vector<8x128xf32> to vector<8x128xbf16>
    %cst_41 = arith.constant dense<0.000000e+00> : vector<8x128xf32>
    %67 = tpu.matmul %66, %12, %cst_41 {dimension_numbers = #tpu.dot_dimension_numbers<[1], [0], [0], [1], [0, 0, 1, 1], [], []>} : vector<8x128xbf16>, vector<128x128xbf16>, vector<8x128xf32> -> vector<8x128xf32>
    %68 = arith.addf %65, %67 : vector<8x128xf32>
    %69 = math.tanh %68 : vector<8x128xf32>
    %70 = arith.index_cast %62 : i32 to index
    %c0_42 = arith.constant 0 : index
    %c0_43 = arith.constant 0 : index
    %71 = vector.load %arg6[%70, %c0_42, %c0_43] : memref<8x8x128xf32, #tpu.memory_space<vmem>>, vector<1x8x128xf32>
    %72 = vector.shape_cast %71 : vector<1x8x128xf32> to vector<8x128xf32>
    %73 = vector.shape_cast %69 : vector<8x128xf32> to vector<1x8x128xf32>
    tpu.vector_store %arg6[%70, %c0_42, %c0_43], %73 {strides = array<i32>} : memref<8x8x128xf32, #tpu.memory_space<vmem>>, vector<1x8x128xf32>,
    %c5_i32 = arith.constant 5 : i32
    %c7_i32_44 = arith.constant 7 : i32
    %74 = arith.subi %c7_i32_44, %c5_i32 : i32
    %75 = arith.index_cast %74 : i32 to index
    %c0_45 = arith.constant 0 : index
    %c0_46 = arith.constant 0 : index
    %76 = vector.load %arg8[%75, %c0_45, %c0_46] : memref<8x8x128xf32, #tpu.memory_space<vmem>>, vector<1x8x128xf32>
    %77 = vector.shape_cast %76 : vector<1x8x128xf32> to vector<8x128xf32>
    %78 = arith.truncf %69 : vector<8x128xf32> to vector<8x128xbf16>
    %cst_47 = arith.constant dense<0.000000e+00> : vector<8x128xf32>
    %79 = tpu.matmul %78, %12, %cst_47 {dimension_numbers = #tpu.dot_dimension_numbers<[1], [0], [0], [1], [0, 0, 1, 1], [], []>} : vector<8x128xbf16>, vector<128x128xbf16>, vector<8x128xf32> -> vector<8x128xf32>
    %80 = arith.addf %77, %79 : vector<8x128xf32>
    %81 = math.tanh %80 : vector<8x128xf32>
    %82 = arith.index_cast %74 : i32 to index
    %c0_48 = arith.constant 0 : index
    %c0_49 = arith.constant 0 : index
    %83 = vector.load %arg6[%82, %c0_48, %c0_49] : memref<8x8x128xf32, #tpu.memory_space<vmem>>, vector<1x8x128xf32>
    %84 = vector.shape_cast %83 : vector<1x8x128xf32> to vector<8x128xf32>
    %85 = vector.shape_cast %81 : vector<8x128xf32> to vector<1x8x128xf32>
    tpu.vector_store %arg6[%82, %c0_48, %c0_49], %85 {strides = array<i32>} : memref<8x8x128xf32, #tpu.memory_space<vmem>>, vector<1x8x128xf32>,
    %c6_i32 = arith.constant 6 : i32
    %c7_i32_50 = arith.constant 7 : i32
    %86 = arith.subi %c7_i32_50, %c6_i32 : i32
    %87 = arith.index_cast %86 : i32 to index
    %c0_51 = arith.constant 0 : index
    %c0_52 = arith.constant 0 : index
    %88 = vector.load %arg8[%87, %c0_51, %c0_52] : memref<8x8x128xf32, #tpu.memory_space<vmem>>, vector<1x8x128xf32>
    %89 = vector.shape_cast %88 : vector<1x8x128xf32> to vector<8x128xf32>
    %90 = arith.truncf %81 : vector<8x128xf32> to vector<8x128xbf16>
    %cst_53 = arith.constant dense<0.000000e+00> : vector<8x128xf32>
    %91 = tpu.matmul %90, %12, %cst_53 {dimension_numbers = #tpu.dot_dimension_numbers<[1], [0], [0], [1], [0, 0, 1, 1], [], []>} : vector<8x128xbf16>, vector<128x128xbf16>, vector<8x128xf32> -> vector<8x128xf32>
    %92 = arith.addf %89, %91 : vector<8x128xf32>
    %93 = math.tanh %92 : vector<8x128xf32>
    %94 = arith.index_cast %86 : i32 to index
    %c0_54 = arith.constant 0 : index
    %c0_55 = arith.constant 0 : index
    %95 = vector.load %arg6[%94, %c0_54, %c0_55] : memref<8x8x128xf32, #tpu.memory_space<vmem>>, vector<1x8x128xf32>
    %96 = vector.shape_cast %95 : vector<1x8x128xf32> to vector<8x128xf32>
    %97 = vector.shape_cast %93 : vector<8x128xf32> to vector<1x8x128xf32>
    tpu.vector_store %arg6[%94, %c0_54, %c0_55], %97 {strides = array<i32>} : memref<8x8x128xf32, #tpu.memory_space<vmem>>, vector<1x8x128xf32>,
    %c7_i32_56 = arith.constant 7 : i32
    %c7_i32_57 = arith.constant 7 : i32
    %98 = arith.subi %c7_i32_57, %c7_i32_56 : i32
    %99 = arith.index_cast %98 : i32 to index
    %c0_58 = arith.constant 0 : index
    %c0_59 = arith.constant 0 : index
    %100 = vector.load %arg8[%99, %c0_58, %c0_59] : memref<8x8x128xf32, #tpu.memory_space<vmem>>, vector<1x8x128xf32>
    %101 = vector.shape_cast %100 : vector<1x8x128xf32> to vector<8x128xf32>
    %102 = arith.truncf %93 : vector<8x128xf32> to vector<8x128xbf16>
    %cst_60 = arith.constant dense<0.000000e+00> : vector<8x128xf32>
    %103 = tpu.matmul %102, %12, %cst_60 {dimension_numbers = #tpu.dot_dimension_numbers<[1], [0], [0], [1], [0, 0, 1, 1], [], []>} : vector<8x128xbf16>, vector<128x128xbf16>, vector<8x128xf32> -> vector<8x128xf32>
    %104 = arith.addf %101, %103 : vector<8x128xf32>
    %105 = math.tanh %104 : vector<8x128xf32>
    %106 = arith.index_cast %98 : i32 to index
    %c0_61 = arith.constant 0 : index
    %c0_62 = arith.constant 0 : index
    %107 = vector.load %arg6[%106, %c0_61, %c0_62] : memref<8x8x128xf32, #tpu.memory_space<vmem>>, vector<1x8x128xf32>
    %108 = vector.shape_cast %107 : vector<1x8x128xf32> to vector<8x128xf32>
    %109 = vector.shape_cast %105 : vector<8x128xf32> to vector<1x8x128xf32>
    tpu.vector_store %arg6[%106, %c0_61, %c0_62], %109 {strides = array<i32>} : memref<8x8x128xf32, #tpu.memory_space<vmem>>, vector<1x8x128xf32>,
    %c8_i32 = arith.constant 8 : i32
    %c0_63 = arith.constant 0 : index
    %c0_64 = arith.constant 0 : index
    %110 = vector.load %arg7[%c0_63, %c0_64] : memref<8x128xf32, #tpu.memory_space<vmem>>, vector<8x128xf32>
    tpu.vector_store %arg7[%c0_63, %c0_64], %105 {strides = array<i32>} : memref<8x128xf32, #tpu.memory_space<vmem>>, vector<8x128xf32>,
    return
  }
  func.func @transform_0(%arg0: i32, %arg1: i32) -> (i32, i32, i32) {
    %c1_i32 = arith.constant 1 : i32
    %0 = arith.subi %c1_i32, %arg1 : i32
    %c0_i32 = arith.constant 0 : i32
    %c0_i32_0 = arith.constant 0 : i32
    return %0, %arg0, %c0_i32 : i32, i32, i32
  }
  func.func @transform_1(%arg0: i32, %arg1: i32) -> (i32, i32) {
    %c0_i32 = arith.constant 0 : i32
    %c0_i32_0 = arith.constant 0 : i32
    %c0_i32_1 = arith.constant 0 : i32
    return %c0_i32, %c0_i32_0 : i32, i32
  }
  func.func @transform_2(%arg0: i32, %arg1: i32) -> (i32, i32) {
    %c0_i32 = arith.constant 0 : i32
    %c0_i32_0 = arith.constant 0 : i32
    %c0_i32_1 = arith.constant 0 : i32
    return %c0_i32, %c0_i32_0 : i32, i32
  }
  func.func @transform_3(%arg0: i32, %arg1: i32) -> (i32, i32) {
    %c0_i32 = arith.constant 0 : i32
    %c0_i32_0 = arith.constant 0 : i32
    %c0_i32_1 = arith.constant 0 : i32
    return %c0_i32, %c0_i32_0 : i32, i32
  }
  func.func @transform_4(%arg0: i32, %arg1: i32) -> (i32, i32, i32) {
    %c1_i32 = arith.constant 1 : i32
    %0 = arith.subi %c1_i32, %arg1 : i32
    %c0_i32 = arith.constant 0 : i32
    %c0_i32_0 = arith.constant 0 : i32
    return %0, %arg0, %c0_i32 : i32, i32, i32
  }
}

</mosaic_0001>

<llo_original>
// kernel: tpu_custom_call.1
$region0: #{tpu_custom_call.1}
  #allocation0 [shape = 'u32[]', space=smem, size = 0x4, offset = 0x4, fixed_abs, tag = 'smem constant byte address 0x4 - core index']
  #allocation1 [shape = 'u32[144,128]{1,0:T(1,128)}', space=vmem, size = 0x12000, scoped, tag = 'internal scratch']
  #allocation2 [shape = 'f32[8,128]{1,0:T(8,128)}', space=vmem, size = 0x1000, scoped, tag = 'scratch operand']
  #allocation3 [shape = 'f32[8,8,128]{2,1,0:T(8,128)}', space=vmem, size = 0x8000, scoped, tag = 'scratch operand']
  %s0 = inlined_call_operand.hbm [shape: bf16[16,8,128], index: 0, kind: input, shape index: {}]
  %s1 = inlined_call_operand.hbm [shape: bf16[128,128], index: 1, kind: input, shape index: {}]
  %s2 = inlined_call_operand.hbm [shape: bf16[128,128], index: 2, kind: input, shape index: {}]
  %s3 = inlined_call_operand.vmem [shape: f32[1,128], index: 3, kind: input, shape index: {}]
  %s4 = inlined_call_operand.hbm [shape: f32[16,8,128], index: 4, kind: output, shape index: {}]
  %s5 = sld [smem:[#allocation0]]
  $region65: #{tpu_custom_call.1} parent=0
    _
  %s7 = ssub.s32 1, %s5
  %s8 = scalar_select 0, %s7, %s5
  $region1: #{tpu_custom_call.1} parent=0
    #allocation4 [shape = 'u8[32768]{0}', space=vmem, size = 0x8000, scoped, tag = 'input window, operand 0']
    #allocation5 [shape = 's32[2]{0}', space=sflag, size = 0x8, scoped, tag = 'scoped memory for tpu_custom_call.1']
    #allocation6 [shape = 's32[2]{0}', space=sflag, size = 0x8, scoped, tag = 'scoped memory for tpu_custom_call.1']
    #allocation7 [shape = 'u8[32768]{0}', space=vmem, size = 0x8000, scoped, tag = 'input window, operand 1, single buffered']
    #allocation8 [shape = 's32[1]{0}', space=sflag, size = 0x4, scoped, tag = 'scoped memory for tpu_custom_call.1']
    #allocation9 [shape = 'u8[32768]{0}', space=vmem, size = 0x8000, scoped, tag = 'input window, operand 2, single buffered']
    #allocation10 [shape = 'u8[65536]{0}', space=vmem, size = 0x10000, scoped, tag = 'output window, operand 0']
    %9 = vsyncpa [#allocation5], 0
    %s10 = scalar_lea.sflag [#allocation5], 1
    %11 = vsyncpa %s10, 0
    %12 = vsyncpa [#allocation8], 0
    %13 = vsyncpa [#allocation6], 0
    %s14 = scalar_lea.sflag [#allocation6], 1
    %15 = vsyncpa %s14, 0
    loop: start=0, step=1, limit=4
    $region2: #{tpu_custom_call.1} parent=1 // loop_pre_header
      _
    $region3: #{tpu_custom_call.1} parent=1 // loop_header
      %s17 = sphi 0, %s21
      %p18 = scmp.ge.s32.totalorder %s17, 4
      %s24 = sphi 0, %s36
      %s25 = sphi 0, %s32
      %s26 = sphi 0, %s24
      %s27 = sphi 0, %s25
      %s28 = sphi 0, %s26
      %s29 = sphi 0, %s27
      %s43 = sphi 0, %s45
      %s46 = sphi 0, %s43
      %s47 = sphi 0, %s46
      %s63 = sphi 0, %s47
      %s67 = sphi 0, %s67
      %s69 = sphi 0, %s67
      %s70 = sphi 0, %s69
      %s84 = sphi 0, %s70
      %s88 = sphi 0, %s88
      %s90 = sphi 0, %s88
      %s91 = sphi 0, %s90
      %s105 = sphi 0, %s91
      %s109 = sphi 0, %s109
      %s111 = sphi 0, %s109
      %s112 = sphi 0, %s111
      %s126 = sphi 0, %s112
      %s136 = sphi 0, %s138
      %s139 = sphi 0, %s136
      %s140 = sphi 0, %s139
      %s156 = sphi 0, %s140
    $region4: #{tpu_custom_call.1} parent=1 // loop_header_branch
      %20 = sbr.rel (%p18) target = $region8
    $region5: #{tpu_custom_call.1} parent=1 // loop_body
      %s22 = ssub.s32 %s17, 1
      %s23 = ssub.s32 %s17, 2
      %s30 = sadd.s32 1, %s25
      %p31 = scmp.ge.s32.totalorder %s30, 2
      %s32 = scalar_select %p31, 0, %s30
      %s33 = sadd.s32 1, %s24
      %s34 = scalar_select %p31, %s33, %s24
      %p35 = scmp.ge.s32.totalorder %s34, 1
      %s36 = scalar_select %p35, 0, %s34
      %s37 = ssub.s32 1, %s25
      %s38 = ssub.s32 1, %s32
      %s39 = ssub.s32 %s37, %s38
      %s40 = ssub.s32 %s24, %s36
      %s41 = sor.u32 %s39, %s40
      %p42 = scmp.eq.s32.totalorder %s41, 0
      %s44 = sadd.s32 %s43, 1
      %s45 = scalar_select %p42, %s43, %s44
      %p48 = pneg %p42
      %p49 = scmp.eq.s32.totalorder %s17, 1
      %p50 = por %p48, %p49
      %p51 = scmp.ne.s32.totalorder %s43, %s46
      %p52 = scmp.eq.s32.totalorder %s17, 0
      %p53 = por %p51, %p52
      %p54 = scmp.ne.s32.totalorder %s43, %s46
      %p55 = scmp.eq.s32.totalorder %s22, 1
      %p56 = por %p54, %p55
      %p57 = scmp.ne.s32.totalorder %s46, %s47
      %p58 = scmp.eq.s32.totalorder %s22, 0
      %p59 = por %p57, %p58
      %p60 = scmp.ne.s32.totalorder %s46, %s47
      %p61 = scmp.eq.s32.totalorder %s23, 1
      %p62 = por %p60, %p61
      %p64 = scmp.ne.s32.totalorder %s47, %s63
      %p65 = scmp.eq.s32.totalorder %s23, 0
      %p66 = por %p64, %p65
      %s68 = sadd.s32 %s67, 1
      %p71 = scmp.eq.s32.totalorder %s17, 1
      %p72 = scmp.ne.s32.totalorder %s67, %s69
      %p73 = scmp.eq.s32.totalorder %s17, 0
      %p74 = por %p72, %p73
      %p75 = scmp.ne.s32.totalorder %s67, %s69
      %p76 = scmp.eq.s32.totalorder %s22, 1
      %p77 = por %p75, %p76
      %p78 = scmp.ne.s32.totalorder %s69, %s70
      %p79 = scmp.eq.s32.totalorder %s22, 0
      %p80 = por %p78, %p79
      %p81 = scmp.ne.s32.totalorder %s69, %s70
      %p82 = scmp.eq.s32.totalorder %s23, 1
      %p83 = por %p81, %p82
      %p85 = scmp.ne.s32.totalorder %s70, %s84
      %p86 = scmp.eq.s32.totalorder %s23, 0
      %p87 = por %p85, %p86
      %s89 = sadd.s32 %s88, 1
      %p92 = scmp.eq.s32.totalorder %s17, 1
      %p93 = scmp.ne.s32.totalorder %s88, %s90
      %p94 = scmp.eq.s32.totalorder %s17, 0
      %p95 = por %p93, %p94
      %p96 = scmp.ne.s32.totalorder %s88, %s90
      %p97 = scmp.eq.s32.totalorder %s22, 1
      %p98 = por %p96, %p97
      %p99 = scmp.ne.s32.totalorder %s90, %s91
      %p100 = scmp.eq.s32.totalorder %s22, 0
      %p101 = por %p99, %p100
      %p102 = scmp.ne.s32.totalorder %s90, %s91
      %p103 = scmp.eq.s32.totalorder %s23, 1
      %p104 = por %p102, %p103
      %p106 = scmp.ne.s32.totalorder %s91, %s105
      %p107 = scmp.eq.s32.totalorder %s23, 0
      %p108 = por %p106, %p107
      %s110 = sadd.s32 %s109, 1
      %p113 = scmp.eq.s32.totalorder %s17, 1
      %p114 = scmp.ne.s32.totalorder %s109, %s111
      %p115 = scmp.eq.s32.totalorder %s17, 0
      %p116 = por %p114, %p115
      %p117 = scmp.ne.s32.totalorder %s109, %s111
      %p118 = scmp.eq.s32.totalorder %s22, 1
      %p119 = por %p117, %p118
      %p120 = scmp.ne.s32.totalorder %s111, %s112
      %p121 = scmp.eq.s32.totalorder %s22, 0
      %p122 = por %p120, %p121
      %p123 = scmp.ne.s32.totalorder %s111, %s112
      %p124 = scmp.eq.s32.totalorder %s23, 1
      %p125 = por %p123, %p124
      %p127 = scmp.ne.s32.totalorder %s112, %s126
      %p128 = scmp.eq.s32.totalorder %s23, 0
      %p129 = por %p127, %p128
      %s130 = ssub.s32 1, %s25
      %s131 = ssub.s32 1, %s32
      %s132 = ssub.s32 %s130, %s131
      %s133 = ssub.s32 %s24, %s36
      %s134 = sor.u32 %s132, %s133
      %p135 = scmp.eq.s32.totalorder %s134, 0
      %s137 = sadd.s32 %s136, 1
      %s138 = scalar_select %p135, %s136, %s137
      %p141 = pneg %p135
      %p142 = scmp.eq.s32.totalorder %s17, 1
      %p143 = por %p141, %p142
      %p144 = scmp.ne.s32.totalorder %s136, %s139
      %p145 = scmp.eq.s32.totalorder %s17, 0
      %p146 = por %p144, %p145
      %p147 = scmp.ne.s32.totalorder %s136, %s139
      %p148 = scmp.eq.s32.totalorder %s22, 1
      %p149 = por %p147, %p148
      %p150 = scmp.ne.s32.totalorder %s139, %s140
      %p151 = scmp.eq.s32.totalorder %s22, 0
      %p152 = por %p150, %p151
      %p153 = scmp.ne.s32.totalorder %s139, %s140
      %p154 = scmp.eq.s32.totalorder %s23, 1
      %p155 = por %p153, %p154
      %p157 = scmp.ne.s32.totalorder %s140, %s156
      %p158 = scmp.eq.s32.totalorder %s23, 0
      %p159 = por %p157, %p158
      %p160 = scmp.le.s32.totalorder 1, %s17
      %p161 = scmp.lt.s32.totalorder %s17, 3
      %p162 = pnand %p160, %p161
      %p163 = pneg %p162
      // Predicated region
      $region9: #{tpu_custom_call.1} parent=5 // pred_check
        _
      $region10: #{tpu_custom_call.1} parent=5 // pred_check_branch
        %165 = sbr.rel (%p162) target = $region12
      $region11: #{tpu_custom_call.1} parent=5 // pred_region
        %s166 = ssub.s32 %s17, 1
        // Predicated region
        $region13: #{tpu_custom_call.1} parent=11 // pred_check
          %p167 = pneg %p80
        $region14: #{tpu_custom_call.1} parent=11 // pred_check_branch
          %169 = sbr.rel (%p167) target = $region16
        $region15: #{tpu_custom_call.1} parent=11 // pred_region
          %s171 = ssub.s32 1024, 1024
          %172 = vsyncadd [#allocation8], %s171
          %s173 = sshll.u32 [#allocation7], 4
          %s174 = int_to_ptr.vmem [resolvable:$true] %s173
          %179 = dma.hbm_to_vmem [thread:$0]  %s1, 1024, %s174, [#allocation8], 64, 64, 4
        $region16: #{tpu_custom_call.1} parent=11 // pred_fallthru
          _
        // Predicated region
        $region17: #{tpu_custom_call.1} parent=11 // pred_check
          %p180 = pneg %p101
        $region18: #{tpu_custom_call.1} parent=11 // pred_check_branch
          %182 = sbr.rel (%p180) target = $region20
        $region19: #{tpu_custom_call.1} parent=11 // pred_region
          %s184 = ssub.s32 1024, 1024
          %185 = vsyncadd [#allocation8], %s184
          %s186 = sshll.u32 [#allocation9], 4
          %s187 = int_to_ptr.vmem [resolvable:$true] %s186
          %192 = dma.hbm_to_vmem [thread:$0]  %s2, 1024, %s187, [#allocation8], 64, 64, 4
        $region20: #{tpu_custom_call.1} parent=11 // pred_fallthru
          _
        // Predicated region
        $region21: #{tpu_custom_call.1} parent=11 // pred_check
          %p193 = pneg %p122
        $region22: #{tpu_custom_call.1} parent=11 // pred_check_branch
          %195 = sbr.rel (%p193) target = $region24
        $region23: #{tpu_custom_call.1} parent=11 // pred_region
          _
        $region24: #{tpu_custom_call.1} parent=11 // pred_fallthru
          _
      $region12: #{tpu_custom_call.1} parent=5 // pred_fallthru
        _
      %p196 = scmp.lt.s32.totalorder %s17, 2
      // Predicated region
      $region25: #{tpu_custom_call.1} parent=5 // pred_check
        %p197 = pneg %p196
      $region26: #{tpu_custom_call.1} parent=5 // pred_check_branch
        %199 = sbr.rel (%p197) target = $region28
      $region27: #{tpu_custom_call.1} parent=5 // pred_region
        // Predicated region
        $region29: #{tpu_custom_call.1} parent=27 // pred_check
          %p200 = pneg %p53
        $region30: #{tpu_custom_call.1} parent=27 // pred_check_branch
          %202 = sbr.rel (%p200) target = $region32
        $region31: #{tpu_custom_call.1} parent=27 // pred_region
          %s203 = sand.u32 %s43, 1
          %s204 = scalar_lea.sflag [#allocation5], %s203
          %s205 = sand.u32 %s43, 1
          %s206 = smul.addr %s205, 32
          %s207 = scalar_lea.vmem [#allocation4], %s206
          %s208 = ssub.s32 1, %s25
          %s209 = smul.u32 8, %s208
          %s211 = ssub.s32 512, 512
          %212 = vsyncadd %s204, %s211
          %s213 = sadd.s32 %s24, %s209
          %s214 = smul.addr %s213, 64
          %s215 = scalar_lea.hbm %s0, %s214
          %s216 = sshll.u32 %s207, 4
          %s217 = int_to_ptr.vmem [resolvable:$true] %s216
          %222 = dma.hbm_to_vmem [thread:$0]  %s215, 512, %s217, %s204, 64, 64, 4
        $region32: #{tpu_custom_call.1} parent=27 // pred_fallthru
          _
      $region28: #{tpu_custom_call.1} parent=5 // pred_fallthru
        _
      %p223 = scmp.le.s32.totalorder 1, %s17
      %p224 = scmp.lt.s32.totalorder %s17, 3
      %p225 = pnand %p223, %p224
      %p226 = pneg %p225
      // Predicated region
      $region33: #{tpu_custom_call.1} parent=5 // pred_check
        _
      $region34: #{tpu_custom_call.1} parent=5 // pred_check_branch
        %228 = sbr.rel (%p225) target = $region36
      $region35: #{tpu_custom_call.1} parent=5 // pred_region
        %s229 = ssub.s32 %s17, 1
        %s230 = sand.u32 %s46, 1
        %s231 = scalar_lea.sflag [#allocation5], %s230
        %s232 = sand.u32 %s46, 1
        %s233 = smul.addr %s232, 32
        %s234 = scalar_lea.vmem [#allocation4], %s233
        // Predicated region
        $region37: #{tpu_custom_call.1} parent=35 // pred_check
          %p235 = pneg %p59
        $region38: #{tpu_custom_call.1} parent=35 // pred_check_branch
          %237 = sbr.rel (%p235) target = $region40
        $region39: #{tpu_custom_call.1} parent=35 // pred_region
          %238 = dma.done %s231, 512
        $region40: #{tpu_custom_call.1} parent=35 // pred_fallthru
          _
        // Predicated region
        $region41: #{tpu_custom_call.1} parent=35 // pred_check
          %p239 = pneg %p80
        $region42: #{tpu_custom_call.1} parent=35 // pred_check_branch
          %241 = sbr.rel (%p239) target = $region44
        $region43: #{tpu_custom_call.1} parent=35 // pred_region
          %242 = dma.done [#allocation8], 1024
        $region44: #{tpu_custom_call.1} parent=35 // pred_fallthru
          _
        // Predicated region
        $region45: #{tpu_custom_call.1} parent=35 // pred_check
          %p243 = pneg %p101
        $region46: #{tpu_custom_call.1} parent=35 // pred_check_branch
          %245 = sbr.rel (%p243) target = $region48
        $region47: #{tpu_custom_call.1} parent=35 // pred_region
          %246 = dma.done [#allocation8], 1024
        $region48: #{tpu_custom_call.1} parent=35 // pred_fallthru
          _
        %s247 = sand.u32 %s46, 1
        %s248 = scalar_lea.sflag [#allocation5], %s247
        %s249 = sand.u32 %s46, 1
        %s250 = smul.addr %s249, 32
        %s251 = scalar_lea.vmem [#allocation4], %s250
        %p252 = pneg %p59
        %p253 = pneg %p56
        %p254 = pneg %p80
        %p255 = pneg %p77
        %p256 = pneg %p101
        %p257 = pneg %p98
        %p258 = pneg %p122
        %p259 = pneg %p119
        %p260 = pneg %p152
        %p261 = pneg %p149
        %s262 = sand.u32 %s139, 1
        %s263 = scalar_lea.sflag [#allocation6], %s262
        %s264 = sand.u32 %s139, 1
        %s265 = smul.addr %s264, 64
        %s266 = scalar_lea.vmem [#allocation10], %s265
        %s267 = ssub.s32 1, %s27
        %s268 = smul.u32 8, %s267
        %s269 = ssub.s32 1, %s27
        %s270 = smul.u32 8, %s269
        %p272 = scmp.eq.s32.totalorder %s27, 0
        // Predicated region
        $region49: #{tpu_custom_call.1} parent=35 // pred_check
          %p273 = pneg %p272
        $region50: #{tpu_custom_call.1} parent=35 // pred_check_branch
          %275 = sbr.rel (%p273) target = $region52
        $region51: #{tpu_custom_call.1} parent=35 // pred_region
          %276 = vst [vmem:[#allocation2] sm:$0xff] 0.0
        $region52: #{tpu_custom_call.1} parent=35 // pred_fallthru
          _
        %v277 = vld [vmem:[%s234] sm:$0xf]
        %v278 = vld [vmem:[%s234 + $0x4] sm:$0xf]
        %v279 = vld [vmem:[%s234 + $0x8] sm:$0xf]
        %v280 = vld [vmem:[%s234 + $0xc] sm:$0xf]
        %v281 = vld [vmem:[%s234 + $0x10] sm:$0xf]
        %v282 = vld [vmem:[%s234 + $0x14] sm:$0xf]
        %v283 = vld [vmem:[%s234 + $0x18] sm:$0xf]
        %v284 = vld [vmem:[%s234 + $0x1c] sm:$0xf]
        %v285 = vld [vmem:[#allocation7] sm:$0xf]
        %v286 = vld [vmem:[#allocation7 + $0x4] sm:$0xf]
        %v287 = vld [vmem:[#allocation7 + $0x8] sm:$0xf]
        %v288 = vld [vmem:[#allocation7 + $0xc] sm:$0xf]
        %v289 = vld [vmem:[#allocation7 + $0x10] sm:$0xf]
        %v290 = vld [vmem:[#allocation7 + $0x14] sm:$0xf]
        %v291 = vld [vmem:[#allocation7 + $0x18] sm:$0xf]
        %v292 = vld [vmem:[#allocation7 + $0x1c] sm:$0xf]
        %v293 = vld [vmem:[#allocation7 + $0x20] sm:$0xf]
        %v294 = vld [vmem:[#allocation7 + $0x24] sm:$0xf]
        %v295 = vld [vmem:[#allocation7 + $0x28] sm:$0xf]
        %v296 = vld [vmem:[#allocation7 + $0x2c] sm:$0xf]
        %v297 = vld [vmem:[#allocation7 + $0x30] sm:$0xf]
        %v298 = vld [vmem:[#allocation7 + $0x34] sm:$0xf]
        %v299 = vld [vmem:[#allocation7 + $0x38] sm:$0xf]
        %v300 = vld [vmem:[#allocation7 + $0x3c] sm:$0xf]
        %v301 = vld [vmem:[%s3] sm:$0x1]
        %v303 = vlaneseq
        %v304 = vshrl.u32 %v303, 7
        %v305 = vsub.s32 0, %v304
        %v306 = vrot.slane %v301, %v305
        %v316 = vunpack.c.l.b16 %v277
        %v317 = vunpack.c.l.b16 %v278
        %v318 = vunpack.c.l.b16 %v279
        %v319 = vunpack.c.l.b16 %v280
        %v320 = vunpack.c.l.b16 %v281
        %v321 = vunpack.c.l.b16 %v282
        %v322 = vunpack.c.l.b16 %v283
        %v323 = vunpack.c.l.b16 %v284
        %v324 = vpack.c.b16 %v317, %v316
        %v325 = vpack.c.b16 %v319, %v318
        %v326 = vpack.c.b16 %v321, %v320
        %v327 = vpack.c.b16 %v323, %v322
        %v348 = vunpack.c.l.b16 %v285
        %v349 = vunpack.c.l.b16 %v286
        %v350 = vunpack.c.l.b16 %v287
        %v351 = vunpack.c.l.b16 %v288
        %v352 = vunpack.c.l.b16 %v289
        %v353 = vunpack.c.l.b16 %v290
        %v354 = vunpack.c.l.b16 %v291
        %v355 = vunpack.c.l.b16 %v292
        %v356 = vunpack.c.l.b16 %v293
        %v357 = vunpack.c.l.b16 %v294
        %v358 = vunpack.c.l.b16 %v295
        %v359 = vunpack.c.l.b16 %v296
        %v360 = vunpack.c.l.b16 %v297
        %v361 = vunpack.c.l.b16 %v298
        %v362 = vunpack.c.l.b16 %v299
        %v363 = vunpack.c.l.b16 %v300
        %v364 = vpack.c.b16 %v349, %v348
        %v365 = vpack.c.b16 %v351, %v350
        %v366 = vpack.c.b16 %v353, %v352
        %v367 = vpack.c.b16 %v355, %v354
        %v368 = vpack.c.b16 %v357, %v356
        %v369 = vpack.c.b16 %v359, %v358
        %v370 = vpack.c.b16 %v361, %v360
        %v371 = vpack.c.b16 %v363, %v362
        %380 = vmatprep.subr.bf16.mxu0 0
        %381 = vmatpush1.bf16.msra.mxu0 %v364
        %382 = vmatprep.subr.bf16.mxu0 0
        %383 = vmatpush1.bf16.msra.mxu0 %v365
        %384 = vmatprep.subr.bf16.mxu0 0
        %385 = vmatpush1.bf16.msra.mxu0 %v366
        %386 = vmatprep.subr.bf16.mxu0 0
        %387 = vmatpush1.bf16.msra.mxu0 %v367
        %388 = vmatprep.subr.bf16.mxu0 0
        %389 = vmatpush1.bf16.msra.mxu0 %v368
        %390 = vmatprep.subr.bf16.mxu0 0
        %391 = vmatpush1.bf16.msra.mxu0 %v369
        %392 = vmatprep.subr.bf16.mxu0 0
        %393 = vmatpush1.bf16.msra.mxu0 %v370
        %394 = vmatprep.subr.bf16.mxu0 0
        %395 = vmatpush1.bf16.msra.mxu0 %v371
        %396 = vmatprep.subr.bf16.mxu0 0
        %397 = vmatpush1.bf16.msra.mxu0 0
        %398 = vmatprep.subr.bf16.mxu0 0
        %399 = vmatpush1.bf16.msra.mxu0 0
        %400 = vmatprep.subr.bf16.mxu0 0
        %401 = vmatpush1.bf16.msra.mxu0 0
        %402 = vmatprep.subr.bf16.mxu0 0
        %403 = vmatpush1.bf16.msra.mxu0 0
        %404 = vmatprep.subr.bf16.mxu0 0
        %405 = vmatpush1.bf16.msra.mxu0 0
        %406 = vmatprep.subr.bf16.mxu0 0
        %407 = vmatpush1.bf16.msra.mxu0 0
        %408 = vmatprep.subr.bf16.mxu0 0
        %409 = vmatpush1.bf16.msra.mxu0 0
        %410 = vmatprep.subr.bf16.mxu0 0
        %411 = vmatpush1.bf16.msra.mxu0 0
        %412 = vmatprep.mubr.bf16.mxu0 0
        %413 = vmatmul.mubr.bf16.gmra.mrb[0].mxu0 %v324
        %v414 = vpop.f32.mrb[0].mxu0
        %v415 = vadd.f32 %v306, %v414
        %v416 = vpop.f32.mrb[0].mxu0
        %v417 = vpop.f32.mrb[0].mxu0
        %v418 = vadd.f32 %v306, %v417
        %v419 = vpop.f32.mrb[0].mxu0
        %420 = vmatprep.mubr.bf16.mxu0 0
        %421 = vmatmul.mubr.bf16.gmra.mrb[0].mxu0 %v325
        %v422 = vpop.f32.mrb[0].mxu0
        %v423 = vadd.f32 %v306, %v422
        %v424 = vpop.f32.mrb[0].mxu0
        %v425 = vpop.f32.mrb[0].mxu0
        %v426 = vadd.f32 %v306, %v425
        %v427 = vpop.f32.mrb[0].mxu0
        %428 = vmatprep.mubr.bf16.mxu0 0
        %429 = vmatmul.mubr.bf16.gmra.mrb[0].mxu0 %v326
        %v430 = vpop.f32.mrb[0].mxu0
        %v431 = vadd.f32 %v306, %v430
        %v432 = vpop.f32.mrb[0].mxu0
        %v433 = vpop.f32.mrb[0].mxu0
        %v434 = vadd.f32 %v306, %v433
        %v435 = vpop.f32.mrb[0].mxu0
        %436 = vmatprep.mubr.bf16.mxu0 0
        %437 = vmatmul.mubr.bf16.gmra.mrb[0].mxu0 %v327
        %v438 = vpop.f32.mrb[0].mxu0
        %v439 = vadd.f32 %v306, %v438
        %v440 = vpop.f32.mrb[0].mxu0
        %v441 = vpop.f32.mrb[0].mxu0
        %v442 = vadd.f32 %v306, %v441
        %v443 = vpop.f32.mrb[0].mxu0
        %444 = vdwg.mxu0
        %445 = vst [vmem:[#allocation3] sm:$0xff] %v415
        %446 = vst [vmem:[#allocation3 + $0x8] sm:$0xff] %v418
        %447 = vst [vmem:[#allocation3 + $0x10] sm:$0xff] %v423
        %448 = vst [vmem:[#allocation3 + $0x18] sm:$0xff] %v426
        %449 = vst [vmem:[#allocation3 + $0x20] sm:$0xff] %v431
        %450 = vst [vmem:[#allocation3 + $0x28] sm:$0xff] %v434
        %451 = vst [vmem:[#allocation3 + $0x30] sm:$0xff] %v439
        %452 = vst [vmem:[#allocation3 + $0x38] sm:$0xff] %v442
        %v453 = vld [vmem:[#allocation9] sm:$0xf]
        %v454 = vld [vmem:[#allocation9 + $0x4] sm:$0xf]
        %v455 = vld [vmem:[#allocation9 + $0x8] sm:$0xf]
        %v456 = vld [vmem:[#allocation9 + $0xc] sm:$0xf]
        %v457 = vld [vmem:[#allocation9 + $0x10] sm:$0xf]
        %v458 = vld [vmem:[#allocation9 + $0x14] sm:$0xf]
        %v459 = vld [vmem:[#allocation9 + $0x18] sm:$0xf]
        %v460 = vld [vmem:[#allocation9 + $0x1c] sm:$0xf]
        %v461 = vld [vmem:[#allocation9 + $0x20] sm:$0xf]
        %v462 = vld [vmem:[#allocation9 + $0x24] sm:$0xf]
        %v463 = vld [vmem:[#allocation9 + $0x28] sm:$0xf]
        %v464 = vld [vmem:[#allocation9 + $0x2c] sm:$0xf]
        %v465 = vld [vmem:[#allocation9 + $0x30] sm:$0xf]
        %v466 = vld [vmem:[#allocation9 + $0x34] sm:$0xf]
        %v467 = vld [vmem:[#allocation9 + $0x38] sm:$0xf]
        %v468 = vld [vmem:[#allocation9 + $0x3c] sm:$0xf]
        %v469 = vld [vmem:[#allocation2] sm:$0xff]
        %s470 = scalar_lea.vmem [#allocation3], 56
        %v471 = vld [vmem:[%s470] sm:$0xff]
        %v472 = vpack.c.bf16 %v469, %v469
        %v489 = vunpack.c.l.b16 %v453
        %v490 = vunpack.c.l.b16 %v454
        %v491 = vunpack.c.l.b16 %v455
        %v492 = vunpack.c.l.b16 %v456
        %v493 = vunpack.c.l.b16 %v457
        %v494 = vunpack.c.l.b16 %v458
        %v495 = vunpack.c.l.b16 %v459
        %v496 = vunpack.c.l.b16 %v460
        %v497 = vunpack.c.l.b16 %v461
        %v498 = vunpack.c.l.b16 %v462
        %v499 = vunpack.c.l.b16 %v463
        %v500 = vunpack.c.l.b16 %v464
        %v501 = vunpack.c.l.b16 %v465
        %v502 = vunpack.c.l.b16 %v466
        %v503 = vunpack.c.l.b16 %v467
        %v504 = vunpack.c.l.b16 %v468
        %v505 = vpack.c.b16 %v490, %v489
        %v506 = vpack.c.b16 %v492, %v491
        %v507 = vpack.c.b16 %v494, %v493
        %v508 = vpack.c.b16 %v496, %v495
        %v509 = vpack.c.b16 %v498, %v497
        %v510 = vpack.c.b16 %v500, %v499
        %v511 = vpack.c.b16 %v502, %v501
        %v512 = vpack.c.b16 %v504, %v503
        %521 = vmatprep.subr.bf16.mxu0 0
        %522 = vmatpush1.bf16.msra.mxu0 %v505
        %523 = vmatprep.subr.bf16.mxu0 0
        %524 = vmatpush1.bf16.msra.mxu0 %v506
        %525 = vmatprep.subr.bf16.mxu0 0
        %526 = vmatpush1.bf16.msra.mxu0 %v507
        %527 = vmatprep.subr.bf16.mxu0 0
        %528 = vmatpush1.bf16.msra.mxu0 %v508
        %529 = vmatprep.subr.bf16.mxu0 0
        %530 = vmatpush1.bf16.msra.mxu0 %v509
        %531 = vmatprep.subr.bf16.mxu0 0
        %532 = vmatpush1.bf16.msra.mxu0 %v510
        %533 = vmatprep.subr.bf16.mxu0 0
        %534 = vmatpush1.bf16.msra.mxu0 %v511
        %535 = vmatprep.subr.bf16.mxu0 0
        %536 = vmatpush1.bf16.msra.mxu0 %v512
        %537 = vmatprep.subr.bf16.mxu0 0
        %538 = vmatpush1.bf16.msra.mxu0 0
        %539 = vmatprep.subr.bf16.mxu0 0
        %540 = vmatpush1.bf16.msra.mxu0 0
        %541 = vmatprep.subr.bf16.mxu0 0
        %542 = vmatpush1.bf16.msra.mxu0 0
        %543 = vmatprep.subr.bf16.mxu0 0
        %544 = vmatpush1.bf16.msra.mxu0 0
        %545 = vmatprep.subr.bf16.mxu0 0
        %546 = vmatpush1.bf16.msra.mxu0 0
        %547 = vmatprep.subr.bf16.mxu0 0
        %548 = vmatpush1.bf16.msra.mxu0 0
        %549 = vmatprep.subr.bf16.mxu0 0
        %550 = vmatpush1.bf16.msra.mxu0 0
        %551 = vmatprep.subr.bf16.mxu0 0
        %552 = vmatpush1.bf16.msra.mxu0 0
        %553 = vmatprep.mubr.bf16.mxu0 0
        %554 = vmatmul.mubr.bf16.gmra.mrb[0].mxu0 %v472
        %v555 = vpop.f32.mrb[0].mxu0
        %v556 = vadd.f32 0.0, %v555
        %v557 = vpop.f32.mrb[0].mxu0
        %v558 = vpop.f32.mrb[0].mxu0
        %v559 = vpop.f32.mrb[0].mxu0
        %560 = vdwg.mxu0
        %v561 = vadd.f32 %v471, %v556
        %v562 = vtanh.pop %v561
        %s563 = scalar_lea.vmem %s266, 56 [#allocation10]
        %564 = vst [vmem:[%s563] sm:$0xff] %v562
        %s565 = scalar_lea.vmem [#allocation3], 48
        %v566 = vld [vmem:[%s565] sm:$0xff]
        %v567 = vpack.c.bf16 %v562, %v562
        %568 = vmatprep.subr.bf16.mxu0 0
        %569 = vmatpush1.bf16.msra.mxu0 %v505
        %570 = vmatprep.subr.bf16.mxu0 0
        %571 = vmatpush1.bf16.msra.mxu0 %v506
        %572 = vmatprep.subr.bf16.mxu0 0
        %573 = vmatpush1.bf16.msra.mxu0 %v507
        %574 = vmatprep.subr.bf16.mxu0 0
        %575 = vmatpush1.bf16.msra.mxu0 %v508
        %576 = vmatprep.subr.bf16.mxu0 0
        %577 = vmatpush1.bf16.msra.mxu0 %v509
        %578 = vmatprep.subr.bf16.mxu0 0
        %579 = vmatpush1.bf16.msra.mxu0 %v510
        %580 = vmatprep.subr.bf16.mxu0 0
        %581 = vmatpush1.bf16.msra.mxu0 %v511
        %582 = vmatprep.subr.bf16.mxu0 0
        %583 = vmatpush1.bf16.msra.mxu0 %v512
        %584 = vmatprep.subr.bf16.mxu0 0
        %585 = vmatpush1.bf16.msra.mxu0 0
        %586 = vmatprep.subr.bf16.mxu0 0
        %587 = vmatpush1.bf16.msra.mxu0 0
        %588 = vmatprep.subr.bf16.mxu0 0
        %589 = vmatpush1.bf16.msra.mxu0 0
        %590 = vmatprep.subr.bf16.mxu0 0
        %591 = vmatpush1.bf16.msra.mxu0 0
        %592 = vmatprep.subr.bf16.mxu0 0
        %593 = vmatpush1.bf16.msra.mxu0 0
        %594 = vmatprep.subr.bf16.mxu0 0
        %595 = vmatpush1.bf16.msra.mxu0 0
        %596 = vmatprep.subr.bf16.mxu0 0
        %597 = vmatpush1.bf16.msra.mxu0 0
        %598 = vmatprep.subr.bf16.mxu0 0
        %599 = vmatpush1.bf16.msra.mxu0 0
        %600 = vmatprep.mubr.bf16.mxu0 0
        %601 = vmatmul.mubr.bf16.gmra.mrb[0].mxu0 %v567
        %v602 = vpop.f32.mrb[0].mxu0
        %v603 = vadd.f32 0.0, %v602
        %v604 = vpop.f32.mrb[0].mxu0
        %v605 = vpop.f32.mrb[0].mxu0
        %v606 = vpop.f32.mrb[0].mxu0
        %607 = vdwg.mxu0
        %v608 = vadd.f32 %v566, %v603
        %v609 = vtanh.pop %v608
        %s610 = scalar_lea.vmem %s266, 48 [#allocation10]
        %611 = vst [vmem:[%s610] sm:$0xff] %v609
        %s612 = scalar_lea.vmem [#allocation3], 40
        %v613 = vld [vmem:[%s612] sm:$0xff]
        %v614 = vpack.c.bf16 %v609, %v609
        %615 = vmatprep.subr.bf16.mxu0 0
        %616 = vmatpush1.bf16.msra.mxu0 %v505
        %617 = vmatprep.subr.bf16.mxu0 0
        %618 = vmatpush1.bf16.msra.mxu0 %v506
        %619 = vmatprep.subr.bf16.mxu0 0
        %620 = vmatpush1.bf16.msra.mxu0 %v507
        %621 = vmatprep.subr.bf16.mxu0 0
        %622 = vmatpush1.bf16.msra.mxu0 %v508
        %623 = vmatprep.subr.bf16.mxu0 0
        %624 = vmatpush1.bf16.msra.mxu0 %v509
        %625 = vmatprep.subr.bf16.mxu0 0
        %626 = vmatpush1.bf16.msra.mxu0 %v510
        %627 = vmatprep.subr.bf16.mxu0 0
        %628 = vmatpush1.bf16.msra.mxu0 %v511
        %629 = vmatprep.subr.bf16.mxu0 0
        %630 = vmatpush1.bf16.msra.mxu0 %v512
        %631 = vmatprep.subr.bf16.mxu0 0
        %632 = vmatpush1.bf16.msra.mxu0 0
        %633 = vmatprep.subr.bf16.mxu0 0
        %634 = vmatpush1.bf16.msra.mxu0 0
        %635 = vmatprep.subr.bf16.mxu0 0
        %636 = vmatpush1.bf16.msra.mxu0 0
        %637 = vmatprep.subr.bf16.mxu0 0
        %638 = vmatpush1.bf16.msra.mxu0 0
        %639 = vmatprep.subr.bf16.mxu0 0
        %640 = vmatpush1.bf16.msra.mxu0 0
        %641 = vmatprep.subr.bf16.mxu0 0
        %642 = vmatpush1.bf16.msra.mxu0 0
        %643 = vmatprep.subr.bf16.mxu0 0
        %644 = vmatpush1.bf16.msra.mxu0 0
        %645 = vmatprep.subr.bf16.mxu0 0
        %646 = vmatpush1.bf16.msra.mxu0 0
        %647 = vmatprep.mubr.bf16.mxu0 0
        %648 = vmatmul.mubr.bf16.gmra.mrb[0].mxu0 %v614
        %v649 = vpop.f32.mrb[0].mxu0
        %v650 = vadd.f32 0.0, %v649
        %v651 = vpop.f32.mrb[0].mxu0
        %v652 = vpop.f32.mrb[0].mxu0
        %v653 = vpop.f32.mrb[0].mxu0
        %654 = vdwg.mxu0
        %v655 = vadd.f32 %v613, %v650
        %v656 = vtanh.pop %v655
        %s657 = scalar_lea.vmem %s266, 40 [#allocation10]
        %658 = vst [vmem:[%s657] sm:$0xff] %v656
        %s659 = scalar_lea.vmem [#allocation3], 32
        %v660 = vld [vmem:[%s659] sm:$0xff]
        %v661 = vpack.c.bf16 %v656, %v656
        %662 = vmatprep.subr.bf16.mxu0 0
        %663 = vmatpush1.bf16.msra.mxu0 %v505
        %664 = vmatprep.subr.bf16.mxu0 0
        %665 = vmatpush1.bf16.msra.mxu0 %v506
        %666 = vmatprep.subr.bf16.mxu0 0
        %667 = vmatpush1.bf16.msra.mxu0 %v507
        %668 = vmatprep.subr.bf16.mxu0 0
        %669 = vmatpush1.bf16.msra.mxu0 %v508
        %670 = vmatprep.subr.bf16.mxu0 0
        %671 = vmatpush1.bf16.msra.mxu0 %v509
        %672 = vmatprep.subr.bf16.mxu0 0
        %673 = vmatpush1.bf16.msra.mxu0 %v510
        %674 = vmatprep.subr.bf16.mxu0 0
        %675 = vmatpush1.bf16.msra.mxu0 %v511
        %676 = vmatprep.subr.bf16.mxu0 0
        %677 = vmatpush1.bf16.msra.mxu0 %v512
        %678 = vmatprep.subr.bf16.mxu0 0
        %679 = vmatpush1.bf16.msra.mxu0 0
        %680 = vmatprep.subr.bf16.mxu0 0
        %681 = vmatpush1.bf16.msra.mxu0 0
        %682 = vmatprep.subr.bf16.mxu0 0
        %683 = vmatpush1.bf16.msra.mxu0 0
        %684 = vmatprep.subr.bf16.mxu0 0
        %685 = vmatpush1.bf16.msra.mxu0 0
        %686 = vmatprep.subr.bf16.mxu0 0
        %687 = vmatpush1.bf16.msra.mxu0 0
        %688 = vmatprep.subr.bf16.mxu0 0
        %689 = vmatpush1.bf16.msra.mxu0 0
        %690 = vmatprep.subr.bf16.mxu0 0
        %691 = vmatpush1.bf16.msra.mxu0 0
        %692 = vmatprep.subr.bf16.mxu0 0
        %693 = vmatpush1.bf16.msra.mxu0 0
        %694 = vmatprep.mubr.bf16.mxu0 0
        %695 = vmatmul.mubr.bf16.gmra.mrb[0].mxu0 %v661
        %v696 = vpop.f32.mrb[0].mxu0
        %v697 = vadd.f32 0.0, %v696
        %v698 = vpop.f32.mrb[0].mxu0
        %v699 = vpop.f32.mrb[0].mxu0
        %v700 = vpop.f32.mrb[0].mxu0
        %701 = vdwg.mxu0
        %v702 = vadd.f32 %v660, %v697
        %v703 = vtanh.pop %v702
        %s704 = scalar_lea.vmem %s266, 32 [#allocation10]
        %705 = vst [vmem:[%s704] sm:$0xff] %v703
        %s706 = scalar_lea.vmem [#allocation3], 24
        %v707 = vld [vmem:[%s706] sm:$0xff]
        %v708 = vpack.c.bf16 %v703, %v703
        %709 = vmatprep.subr.bf16.mxu0 0
        %710 = vmatpush1.bf16.msra.mxu0 %v505
        %711 = vmatprep.subr.bf16.mxu0 0
        %712 = vmatpush1.bf16.msra.mxu0 %v506
        %713 = vmatprep.subr.bf16.mxu0 0
        %714 = vmatpush1.bf16.msra.mxu0 %v507
        %715 = vmatprep.subr.bf16.mxu0 0
        %716 = vmatpush1.bf16.msra.mxu0 %v508
        %717 = vmatprep.subr.bf16.mxu0 0
        %718 = vmatpush1.bf16.msra.mxu0 %v509
        %719 = vmatprep.subr.bf16.mxu0 0
        %720 = vmatpush1.bf16.msra.mxu0 %v510
        %721 = vmatprep.subr.bf16.mxu0 0
        %722 = vmatpush1.bf16.msra.mxu0 %v511
        %723 = vmatprep.subr.bf16.mxu0 0
        %724 = vmatpush1.bf16.msra.mxu0 %v512
        %725 = vmatprep.subr.bf16.mxu0 0
        %726 = vmatpush1.bf16.msra.mxu0 0
        %727 = vmatprep.subr.bf16.mxu0 0
        %728 = vmatpush1.bf16.msra.mxu0 0
        %729 = vmatprep.subr.bf16.mxu0 0
        %730 = vmatpush1.bf16.msra.mxu0 0
        %731 = vmatprep.subr.bf16.mxu0 0
        %732 = vmatpush1.bf16.msra.mxu0 0
        %733 = vmatprep.subr.bf16.mxu0 0
        %734 = vmatpush1.bf16.msra.mxu0 0
        %735 = vmatprep.subr.bf16.mxu0 0
        %736 = vmatpush1.bf16.msra.mxu0 0
        %737 = vmatprep.subr.bf16.mxu0 0
        %738 = vmatpush1.bf16.msra.mxu0 0
        %739 = vmatprep.subr.bf16.mxu0 0
        %740 = vmatpush1.bf16.msra.mxu0 0
        %741 = vmatprep.mubr.bf16.mxu0 0
        %742 = vmatmul.mubr.bf16.gmra.mrb[0].mxu0 %v708
        %v743 = vpop.f32.mrb[0].mxu0
        %v744 = vadd.f32 0.0, %v743
        %v745 = vpop.f32.mrb[0].mxu0
        %v746 = vpop.f32.mrb[0].mxu0
        %v747 = vpop.f32.mrb[0].mxu0
        %748 = vdwg.mxu0
        %v749 = vadd.f32 %v707, %v744
        %v750 = vtanh.pop %v749
        %s751 = scalar_lea.vmem %s266, 24 [#allocation10]
        %752 = vst [vmem:[%s751] sm:$0xff] %v750
        %s753 = scalar_lea.vmem [#allocation3], 16
        %v754 = vld [vmem:[%s753] sm:$0xff]
        %v755 = vpack.c.bf16 %v750, %v750
        %756 = vmatprep.subr.bf16.mxu0 0
        %757 = vmatpush1.bf16.msra.mxu0 %v505
        %758 = vmatprep.subr.bf16.mxu0 0
        %759 = vmatpush1.bf16.msra.mxu0 %v506
        %760 = vmatprep.subr.bf16.mxu0 0
        %761 = vmatpush1.bf16.msra.mxu0 %v507
        %762 = vmatprep.subr.bf16.mxu0 0
        %763 = vmatpush1.bf16.msra.mxu0 %v508
        %764 = vmatprep.subr.bf16.mxu0 0
        %765 = vmatpush1.bf16.msra.mxu0 %v509
        %766 = vmatprep.subr.bf16.mxu0 0
        %767 = vmatpush1.bf16.msra.mxu0 %v510
        %768 = vmatprep.subr.bf16.mxu0 0
        %769 = vmatpush1.bf16.msra.mxu0 %v511
        %770 = vmatprep.subr.bf16.mxu0 0
        %771 = vmatpush1.bf16.msra.mxu0 %v512
        %772 = vmatprep.subr.bf16.mxu0 0
        %773 = vmatpush1.bf16.msra.mxu0 0
        %774 = vmatprep.subr.bf16.mxu0 0
        %775 = vmatpush1.bf16.msra.mxu0 0
        %776 = vmatprep.subr.bf16.mxu0 0
        %777 = vmatpush1.bf16.msra.mxu0 0
        %778 = vmatprep.subr.bf16.mxu0 0
        %779 = vmatpush1.bf16.msra.mxu0 0
        %780 = vmatprep.subr.bf16.mxu0 0
        %781 = vmatpush1.bf16.msra.mxu0 0
        %782 = vmatprep.subr.bf16.mxu0 0
        %783 = vmatpush1.bf16.msra.mxu0 0
        %784 = vmatprep.subr.bf16.mxu0 0
        %785 = vmatpush1.bf16.msra.mxu0 0
        %786 = vmatprep.subr.bf16.mxu0 0
        %787 = vmatpush1.bf16.msra.mxu0 0
        %788 = vmatprep.mubr.bf16.mxu0 0
        %789 = vmatmul.mubr.bf16.gmra.mrb[0].mxu0 %v755
        %v790 = vpop.f32.mrb[0].mxu0
        %v791 = vadd.f32 0.0, %v790
        %v792 = vpop.f32.mrb[0].mxu0
        %v793 = vpop.f32.mrb[0].mxu0
        %v794 = vpop.f32.mrb[0].mxu0
        %795 = vdwg.mxu0
        %v796 = vadd.f32 %v754, %v791
        %v797 = vtanh.pop %v796
        %s798 = scalar_lea.vmem %s266, 16 [#allocation10]
        %799 = vst [vmem:[%s798] sm:$0xff] %v797
        %s800 = scalar_lea.vmem [#allocation3], 8
        %v801 = vld [vmem:[%s800] sm:$0xff]
        %v802 = vpack.c.bf16 %v797, %v797
        %803 = vmatprep.subr.bf16.mxu0 0
        %804 = vmatpush1.bf16.msra.mxu0 %v505
        %805 = vmatprep.subr.bf16.mxu0 0
        %806 = vmatpush1.bf16.msra.mxu0 %v506
        %807 = vmatprep.subr.bf16.mxu0 0
        %808 = vmatpush1.bf16.msra.mxu0 %v507
        %809 = vmatprep.subr.bf16.mxu0 0
        %810 = vmatpush1.bf16.msra.mxu0 %v508
        %811 = vmatprep.subr.bf16.mxu0 0
        %812 = vmatpush1.bf16.msra.mxu0 %v509
        %813 = vmatprep.subr.bf16.mxu0 0
        %814 = vmatpush1.bf16.msra.mxu0 %v510
        %815 = vmatprep.subr.bf16.mxu0 0
        %816 = vmatpush1.bf16.msra.mxu0 %v511
        %817 = vmatprep.subr.bf16.mxu0 0
        %818 = vmatpush1.bf16.msra.mxu0 %v512
        %819 = vmatprep.subr.bf16.mxu0 0
        %820 = vmatpush1.bf16.msra.mxu0 0
        %821 = vmatprep.subr.bf16.mxu0 0
        %822 = vmatpush1.bf16.msra.mxu0 0
        %823 = vmatprep.subr.bf16.mxu0 0
        %824 = vmatpush1.bf16.msra.mxu0 0
        %825 = vmatprep.subr.bf16.mxu0 0
        %826 = vmatpush1.bf16.msra.mxu0 0
        %827 = vmatprep.subr.bf16.mxu0 0
        %828 = vmatpush1.bf16.msra.mxu0 0
        %829 = vmatprep.subr.bf16.mxu0 0
        %830 = vmatpush1.bf16.msra.mxu0 0
        %831 = vmatprep.subr.bf16.mxu0 0
        %832 = vmatpush1.bf16.msra.mxu0 0
        %833 = vmatprep.subr.bf16.mxu0 0
        %834 = vmatpush1.bf16.msra.mxu0 0
        %835 = vmatprep.mubr.bf16.mxu0 0
        %836 = vmatmul.mubr.bf16.gmra.mrb[0].mxu0 %v802
        %v837 = vpop.f32.mrb[0].mxu0
        %v838 = vadd.f32 0.0, %v837
        %v839 = vpop.f32.mrb[0].mxu0
        %v840 = vpop.f32.mrb[0].mxu0
        %v841 = vpop.f32.mrb[0].mxu0
        %842 = vdwg.mxu0
        %v843 = vadd.f32 %v801, %v838
        %v844 = vtanh.pop %v843
        %s845 = scalar_lea.vmem %s266, 8 [#allocation10]
        %846 = vst [vmem:[%s845] sm:$0xff] %v844
        %v847 = vld [vmem:[#allocation3] sm:$0xff]
        %v848 = vpack.c.bf16 %v844, %v844
        %849 = vmatprep.subr.bf16.mxu0 0
        %850 = vmatpush1.bf16.msra.mxu0 %v505
        %851 = vmatprep.subr.bf16.mxu0 0
        %852 = vmatpush1.bf16.msra.mxu0 %v506
        %853 = vmatprep.subr.bf16.mxu0 0
        %854 = vmatpush1.bf16.msra.mxu0 %v507
        %855 = vmatprep.subr.bf16.mxu0 0
        %856 = vmatpush1.bf16.msra.mxu0 %v508
        %857 = vmatprep.subr.bf16.mxu0 0
        %858 = vmatpush1.bf16.msra.mxu0 %v509
        %859 = vmatprep.subr.bf16.mxu0 0
        %860 = vmatpush1.bf16.msra.mxu0 %v510
        %861 = vmatprep.subr.bf16.mxu0 0
        %862 = vmatpush1.bf16.msra.mxu0 %v511
        %863 = vmatprep.subr.bf16.mxu0 0
        %864 = vmatpush1.bf16.msra.mxu0 %v512
        %865 = vmatprep.subr.bf16.mxu0 0
        %866 = vmatpush1.bf16.msra.mxu0 0
        %867 = vmatprep.subr.bf16.mxu0 0
        %868 = vmatpush1.bf16.msra.mxu0 0
        %869 = vmatprep.subr.bf16.mxu0 0
        %870 = vmatpush1.bf16.msra.mxu0 0
        %871 = vmatprep.subr.bf16.mxu0 0
        %872 = vmatpush1.bf16.msra.mxu0 0
        %873 = vmatprep.subr.bf16.mxu0 0
        %874 = vmatpush1.bf16.msra.mxu0 0
        %875 = vmatprep.subr.bf16.mxu0 0
        %876 = vmatpush1.bf16.msra.mxu0 0
        %877 = vmatprep.subr.bf16.mxu0 0
        %878 = vmatpush1.bf16.msra.mxu0 0
        %879 = vmatprep.subr.bf16.mxu0 0
        %880 = vmatpush1.bf16.msra.mxu0 0
        %881 = vmatprep.mubr.bf16.mxu0 0
        %882 = vmatmul.mubr.bf16.gmra.mrb[0].mxu0 %v848
        %v883 = vpop.f32.mrb[0].mxu0
        %v884 = vadd.f32 0.0, %v883
        %v885 = vpop.f32.mrb[0].mxu0
        %v886 = vpop.f32.mrb[0].mxu0
        %v887 = vpop.f32.mrb[0].mxu0
        %888 = vdwg.mxu0
        %v889 = vadd.f32 %v847, %v884
        %v890 = vtanh.pop %v889
        %891 = vst [vmem:[%s266] sm:$0xff] %v890
        %892 = vst [vmem:[#allocation2] sm:$0xff] %v890
        %s893 = sand.u32 %s139, 1
        %s894 = scalar_lea.sflag [#allocation6], %s893
        %s895 = sand.u32 %s139, 1
        %s896 = smul.addr %s895, 64
        %s897 = scalar_lea.vmem [#allocation10], %s896
        // Predicated region
        $region53: #{tpu_custom_call.1} parent=35 // pred_check
          %p898 = pneg %p149
        $region54: #{tpu_custom_call.1} parent=35 // pred_check_branch
          %900 = sbr.rel (%p898) target = $region56
        $region55: #{tpu_custom_call.1} parent=35 // pred_region
          %s901 = ssub.s32 1, %s27
          %s902 = smul.u32 8, %s901
          %s904 = ssub.s32 1024, 1024
          %905 = vsyncadd %s894, %s904
          %s906 = sadd.s32 %s26, %s902
          %s907 = smul.addr %s906, 128
          %s908 = scalar_lea.hbm %s4, %s907
          %s909 = sshll.u32 %s897, 4
          %s910 = int_to_ptr.vmem [resolvable:$true] %s909
          %915 = dma.vmem_to_hbm [thread:$0]  %s910, 1024, %s908, %s894, 128, 128, 8
        $region56: #{tpu_custom_call.1} parent=35 // pred_fallthru
          _
      $region36: #{tpu_custom_call.1} parent=5 // pred_fallthru
        _
      %p916 = scmp.le.s32.totalorder 2, %s17
      // Predicated region
      $region57: #{tpu_custom_call.1} parent=5 // pred_check
        %p917 = pneg %p916
      $region58: #{tpu_custom_call.1} parent=5 // pred_check_branch
        %919 = sbr.rel (%p917) target = $region60
      $region59: #{tpu_custom_call.1} parent=5 // pred_region
        %s920 = ssub.s32 %s17, 2
        // Predicated region
        $region61: #{tpu_custom_call.1} parent=59 // pred_check
          %p921 = pneg %p155
        $region62: #{tpu_custom_call.1} parent=59 // pred_check_branch
          %923 = sbr.rel (%p921) target = $region64
        $region63: #{tpu_custom_call.1} parent=59 // pred_region
          %s924 = sand.u32 %s140, 1
          %s925 = scalar_lea.sflag [#allocation6], %s924
          %s926 = sand.u32 %s140, 1
          %s927 = smul.addr %s926, 64
          %s928 = scalar_lea.vmem [#allocation10], %s927
          %929 = dma.done %s925, 1024
        $region64: #{tpu_custom_call.1} parent=59 // pred_fallthru
          _
      $region60: #{tpu_custom_call.1} parent=5 // pred_fallthru
        _
    $region6: #{tpu_custom_call.1} parent=1 // loop_footer
      %s21 = sadd.s32 1, %s17
    $region7: #{tpu_custom_call.1} parent=1 // loop_footer_branch
      %16 = sbr.rel target = $region3
    $region8: #{tpu_custom_call.1} parent=1 // loop_exit
      _
    %930 = vsyncpa [#allocation5], 1
    %s931 = scalar_lea.sflag [#allocation5], 1
    %932 = vsyncpa %s931, 1
    %933 = vsyncpa [#allocation8], 1
    %934 = vsyncpa [#allocation6], 1
    %s935 = scalar_lea.sflag [#allocation6], 1
    %936 = vsyncpa %s935, 1

</llo_original>
